<compile_context>
chip_gen: v6e
topology: v6e:2x2x1
jax: 0.10.0
libtpu: 0.0.40
codegen_flags: <defaults>
</compile_context>

<pallas_src>
import numpy as np
import jax
import jax.numpy as jnp
from jax.experimental import pallas as pl
from jax.experimental.pallas import tpu as pltpu

_LANE = 128
_SUBLANE = 8
_MAX_TILE_ROWS = 2048          # 2048x128 f32 = 1 MiB/stream tile; 3 streams x 2 bufs = 6 MiB
_NUM_PARALLEL = 2              # leading 'parallel' super-blocks: both TCs on v7x, serial on v5e/v6e
_VMEM_LIMIT = 32 * 1024 * 1024  # fits default scoped VMEM headroom on v5e/v6e/v7x


def _cdiv(a, b):
    return -(-a // b)


def _round_up(a, b):
    return _cdiv(a, b) * b


# ----------------------------------------------------------------------------
# Kernel 1: wrapped-model forward   y = relu(x @ w1 + b1) @ w2 + b2
# ----------------------------------------------------------------------------
def _mlp_fwd_kernel(x_ref, w1_ref, b1_ref, w2_ref, b2_ref, o_ref):
    # bf16 operands on the MXU, f32 accumulation / bias / relu path.
    x = x_ref[...].astype(jnp.bfloat16)
    w1 = w1_ref[...].astype(jnp.bfloat16)
    h = jnp.dot(x, w1, preferred_element_type=jnp.float32)
    h = jnp.maximum(h + b1_ref[...], 0.0)
    w2 = w2_ref[...].astype(jnp.bfloat16)
    o = jnp.dot(h.astype(jnp.bfloat16), w2, preferred_element_type=jnp.float32)
    o_ref[...] = (o + b2_ref[...]).astype(o_ref.dtype)


def _pick_batch_tile(batch):
    # Prefer >=2 sublane-aligned batch tiles so the 'parallel' axis can be sharded
    # across both TensorCores on v7x; cap tile at 128 rows; fall back to one block.
    for tb in (128, 64, 32, 16, 8):
        if batch % tb == 0 and batch // tb >= 2:
            return tb
    return batch


def mlp_forward(x, w1, b1, w2, b2):
    B, D_in = x.shape
    H = w1.shape[1]
    D_out = w2.shape[1]
    tb = _pick_batch_tile(B)
    grid = (B // tb,)
    return pl.pallas_call(
        _mlp_fwd_kernel,
        out_shape=jax.ShapeDtypeStruct((B, D_out), jnp.float32),
        grid=grid,
        in_specs=[
            pl.BlockSpec((tb, D_in), lambda i: (i, 0)),
            pl.BlockSpec((D_in, H), lambda i: (0, 0)),
            pl.BlockSpec((1, H), lambda i: (0, 0)),
            pl.BlockSpec((H, D_out), lambda i: (0, 0)),
            pl.BlockSpec((1, D_out), lambda i: (0, 0)),
        ],
        out_specs=pl.BlockSpec((tb, D_out), lambda i: (i, 0)),
        compiler_params=pltpu.CompilerParams(
            dimension_semantics=("parallel",),
            vmem_limit_bytes=_VMEM_LIMIT,
        ),
    )(x, w1, b1, w2, b2)


# ----------------------------------------------------------------------------
# Kernel 2: row-tiled EWC consolidation reduction
#   partial[core] = sum over its row tiles of coeff * (param - mean)^2
# ----------------------------------------------------------------------------
def _accumulate(contrib, acc_ref, j):
    # VPU-only per-step work: fold (TR,128) tile into the (8,128) accumulator.
    @pl.when(j == 0)
    def _():
        acc_ref[...] = jnp.zeros_like(acc_ref)

    tr = contrib.shape[0]
    acc_ref[...] += contrib.reshape(tr // _SUBLANE, _SUBLANE, _LANE).sum(axis=0)


def _ewc_reduce_kernel(p_ref, m_ref, f_ref, o_ref, acc_ref):
    j = pl.program_id(1)
    d = p_ref[...] - m_ref[...]
    _accumulate(f_ref[...] * d * d, acc_ref, j)

    @pl.when(j == pl.num_programs(1) - 1)
    def _():
        o_ref[...] = acc_ref[...].reshape(1, _SUBLANE, _LANE)


def _l2_reduce_kernel(p_ref, m_ref, o_ref, acc_ref):
    # constant 1e-5 coefficient is folded into the host-side scale (no coeff stream)
    j = pl.program_id(1)
    d = p_ref[...] - m_ref[...]
    _accumulate(d * d, acc_ref, j)

    @pl.when(j == pl.num_programs(1) - 1)
    def _():
        o_ref[...] = acc_ref[...].reshape(1, _SUBLANE, _LANE)


def _reduce_partial_sums(kernel, slabs, tile_rows, inner_tiles):
    def _spec():
        return pl.BlockSpec((tile_rows, _LANE), lambda i, j: (i * inner_tiles + j, 0))

    return pl.pallas_call(
        kernel,
        out_shape=jax.ShapeDtypeStruct((_NUM_PARALLEL, _SUBLANE, _LANE), jnp.float32),
        grid=(_NUM_PARALLEL, inner_tiles),
        in_specs=[_spec() for _ in slabs],
        out_specs=pl.BlockSpec((1, _SUBLANE, _LANE), lambda i, j: (i, 0, 0)),
        scratch_shapes=[pltpu.VMEM((_SUBLANE, _LANE), jnp.float32)],
        compiler_params=pltpu.CompilerParams(
            dimension_semantics=("parallel", "arbitrary"),
            vmem_limit_bytes=_VMEM_LIMIT,
        ),
    )(*slabs)


# ----------------------------------------------------------------------------
# Packing glue (plain JAX): flatten params -> lane-dense [rows, 128] f32 slab.
# Zero padding is harmless: (p - m) == 0 and fisher == 0 in the padded region.
# ----------------------------------------------------------------------------
def _plan_rows(n_elems):
    rows = _round_up(max(_cdiv(max(n_elems, 1), _LANE), 1), _SUBLANE)
    per_super = _round_up(_cdiv(rows, _NUM_PARALLEL), _SUBLANE)
    tile_rows = min(_MAX_TILE_ROWS, per_super)
    inner_tiles = _cdiv(per_super, tile_rows)
    total_rows = _NUM_PARALLEL * inner_tiles * tile_rows
    return total_rows, tile_rows, inner_tiles


def _pack_to_slab(arrays, total_rows):
    flat = jnp.concatenate([jnp.ravel(a).astype(jnp.float32) for a in arrays])
    pad = total_rows * _LANE - flat.shape[0]
    flat = jnp.pad(flat, (0, pad))
    return flat.reshape(total_rows, _LANE)


# ----------------------------------------------------------------------------
# EWC wrapper (host-side bookkeeping mirrors the PyTorch class)
# ----------------------------------------------------------------------------
class EWC:
    def __init__(self, params, ewc_lambda=0.0, ewc_type="ewc"):
        self.params = dict(params)      # wrapped model's parameters (name -> array)
        self.ewc_lambda = float(ewc_lambda)
        self.ewc_type = ewc_type
        self.means = None
        self.fishers = None
        # cached packing plan / slabs (filled at register_ewc_params time)
        self._ewc_names = None
        self._plan = None
        self._m_slab = None
        self._f_slab = None

    def register_ewc_params(self, fishers):
        # TODO(synk): true Fisher estimation requires autograd over a data loader
        # (PyTorch _update_fisher_params); fisher values are provided synthetically.
        self.fishers = dict(fishers)
        self.means = {k: v for k, v in self.params.items()}  # _update_mean_params clone

        # Params whose fisher is None contribute exactly 0 -> exclude from the slabs.
        self._ewc_names = [k for k in self.params if self.fishers.get(k) is not None]
        n_elems = sum(int(np.prod(self.params[k].shape)) for k in self._ewc_names)
        self._plan = _plan_rows(n_elems)
        total_rows = self._plan[0]

        if self._ewc_names:
            # Pack the static slabs ONCE here (not per loss call).
            self._m_slab = _pack_to_slab([self.means[k] for k in self._ewc_names], total_rows)
            if self.ewc_type != "l2":
                # TODO(synk): fisher could be stored bf16 (upcast in-kernel) to cut
                # HBM traffic by ~17% at a small precision cost.
                self._f_slab = _pack_to_slab([self.fishers[k] for k in self._ewc_names], total_rows)

    def compute_consolidation_loss(self):
        if not self._ewc_names:
            return jnp.float32(0.0)
        total_rows, tile_rows, inner_tiles = self._plan
        # Only the live-parameter slab is repacked per call.
        p_slab = _pack_to_slab([self.params[k] for k in self._ewc_names], total_rows)

        if self.ewc_type == "l2":
            partials = _reduce_partial_sums(
                _l2_reduce_kernel, (p_slab, self._m_slab), tile_rows, inner_tiles)
            total = jnp.sum(partials) * jnp.float32(1e-5)
        else:
            partials = _reduce_partial_sums(
                _ewc_reduce_kernel, (p_slab, self._m_slab, self._f_slab), tile_rows, inner_tiles)
            total = jnp.sum(partials)
        return 1.0 * (self.ewc_lambda / 2.0) * total

    def forward(self, data):
        p = self.params
        return mlp_forward(data, p["w1"], p["b1"], p["w2"], p["b2"])


# ----------------------------------------------------------------------------
if __name__ == "__main__":
    key = jax.random.PRNGKey(0)
    ks = jax.random.split(key, 8)

    # Lane-dense toy model: D_IN/H/D_OUT multiples of 128, batch multiple of 8.
    B, D_IN, H, D_OUT = 16, 128, 256, 128
    x = jax.random.normal(ks[0], (B, D_IN), jnp.float32)

    params = {
        "w1": jax.random.normal(ks[1], (D_IN, H), jnp.float32) * 0.1,
        "b1": jax.random.normal(ks[2], (1, H), jnp.float32) * 0.1,
        "w2": jax.random.normal(ks[3], (H, D_OUT), jnp.float32) * 0.1,
        "b2": jax.random.normal(ks[4], (1, D_OUT), jnp.float32) * 0.1,
    }

    ewc = EWC(params, ewc_lambda=0.4, ewc_type="ewc")

    # synthetic positive fisher estimates; b2 marked skipped (None) to mirror the
    # node-embedding exclusion path in the PyTorch code.
    fishers = {
        "w1": jax.random.uniform(ks[5], (D_IN, H), jnp.float32),
        "b1": jnp.full((1, H), 0.5, jnp.float32),
        "w2": jax.random.uniform(ks[6], (H, D_OUT), jnp.float32),
        "b2": None,
    }
    ewc.register_ewc_params(fishers)

    # simulate post-consolidation training: perturb current params away from means
    n_total = sum(int(np.prod(v.shape)) for v in params.values())
    deltas = jax.random.normal(ks[7], (n_total,), jnp.float32) * 0.01
    off = 0
    for k in ["w1", "b1", "w2", "b2"]:
        sz = int(np.prod(params[k].shape))
        ewc.params[k] = params[k] + deltas[off:off + sz].reshape(params[k].shape)
        off += sz

    # ---- Pallas forward (EWC.forward == wrapped model forward) ----
    y = jax.block_until_ready(ewc.forward(x))

    p = ewc.params
    # reference matching the in-kernel bf16 operand / f32 accumulate path
    h_ref = jnp.maximum(
        jnp.dot(x.astype(jnp.bfloat16), p["w1"].astype(jnp.bfloat16),
                preferred_element_type=jnp.float32) + p["b1"], 0.0)
    y_ref_bf16 = jnp.dot(h_ref.astype(jnp.bfloat16), p["w2"].astype(jnp.bfloat16),
                         preferred_element_type=jnp.float32) + p["b2"]
    assert np.allclose(np.asarray(y), np.asarray(y_ref_bf16), rtol=1e-3, atol=1e-3)
    # loose check against the full-f32 module semantics (bf16 MXU error ~0.4%)
    y_ref_f32 = jnp.maximum(x @ p["w1"] + p["b1"], 0.0) @ p["w2"] + p["b2"]
    assert np.allclose(np.asarray(y), np.asarray(y_ref_f32), rtol=5e-2, atol=5e-2)

    # ---- Pallas consolidation loss ----
    loss = jax.block_until_ready(ewc.compute_consolidation_loss())

    loss_ref = 0.0
    for k in ["w1", "b1", "w2", "b2"]:
        if fishers[k] is None:
            continue
        loss_ref += jnp.sum(fishers[k] * (ewc.params[k] - ewc.means[k]) ** 2)
    loss_ref = (0.4 / 2.0) * loss_ref
    assert np.allclose(float(loss), float(loss_ref), rtol=1e-4, atol=1e-6)

    print("KERNEL_OK")
</pallas_src>

<mosaic_0001>
module attributes {stable_mosaic.version = 11 : i64} {
  func.func @_mlp_fwd_kernel(%arg0: i32, %arg1: memref<8x128xf32, #tpu.memory_space<vmem>>, %arg2: memref<128x256xf32, #tpu.memory_space<vmem>>, %arg3: memref<1x256xf32, #tpu.memory_space<vmem>>, %arg4: memref<256x128xf32, #tpu.memory_space<vmem>>, %arg5: memref<1x128xf32, #tpu.memory_space<vmem>>, %arg6: memref<8x128xf32, #tpu.memory_space<vmem>>) attributes {dimension_semantics = [#tpu.dimension_semantics<parallel>], iteration_bounds = array<i64: 2>, scalar_prefetch = 0 : i64, scratch_operands = 0 : i64, tpu.core_type = #tpu.core_type<tc>, window_params = [{transform_indices = @transform_0, window_bounds = array<i64: 8, 128>}, {pipeline_mode = #tpu.pipeline_mode<synchronous>, transform_indices = @transform_1, window_bounds = array<i64: 128, 256>}, {pipeline_mode = #tpu.pipeline_mode<synchronous>, transform_indices = @transform_2, window_bounds = array<i64: 1, 256>}, {pipeline_mode = #tpu.pipeline_mode<synchronous>, transform_indices = @transform_3, window_bounds = array<i64: 256, 128>}, {pipeline_mode = #tpu.pipeline_mode<synchronous>, transform_indices = @transform_4, window_bounds = array<i64: 1, 128>}, {transform_indices = @transform_5, window_bounds = array<i64: 8, 128>}]} {
    %c0 = arith.constant 0 : index
    %c0_0 = arith.constant 0 : index
    %0 = vector.load %arg1[%c0, %c0_0] : memref<8x128xf32, #tpu.memory_space<vmem>>, vector<8x128xf32>
    %1 = arith.truncf %0 : vector<8x128xf32> to vector<8x128xbf16>
    %c0_1 = arith.constant 0 : index
    %c0_2 = arith.constant 0 : index
    %2 = vector.load %arg2[%c0_1, %c0_2] : memref<128x256xf32, #tpu.memory_space<vmem>>, vector<128x256xf32>
    %3 = arith.truncf %2 : vector<128x256xf32> to vector<128x256xbf16>
    %cst = arith.constant dense<0.000000e+00> : vector<8x256xf32>
    %4 = tpu.matmul %1, %3, %cst {dimension_numbers = #tpu.dot_dimension_numbers<[1], [0], [0], [1], [0, 0, 1, 1], [], []>} : vector<8x128xbf16>, vector<128x256xbf16>, vector<8x256xf32> -> vector<8x256xf32>
    %c0_3 = arith.constant 0 : index
    %c0_4 = arith.constant 0 : index
    %5 = vector.load %arg3[%c0_3, %c0_4] : memref<1x256xf32, #tpu.memory_space<vmem>>, vector<1x256xf32>
    %6 = vector.broadcast %5 : vector<1x256xf32> to vector<8x256xf32>
    %7 = arith.addf %4, %6 : vector<8x256xf32>
    %cst_5 = arith.constant 0.000000e+00 : f32
    %8 = vector.broadcast %cst_5 : f32 to vector<8x256xf32>
    %9 = arith.maximumf %7, %8 : vector<8x256xf32>
    %c0_6 = arith.constant 0 : index
    %c0_7 = arith.constant 0 : index
    %10 = vector.load %arg4[%c0_6, %c0_7] : memref<256x128xf32, #tpu.memory_space<vmem>>, vector<256x128xf32>
    %11 = arith.truncf %10 : vector<256x128xf32> to vector<256x128xbf16>
    %12 = arith.truncf %9 : vector<8x256xf32> to vector<8x256xbf16>
    %cst_8 = arith.constant dense<0.000000e+00> : vector<8x128xf32>
    %13 = tpu.matmul %12, %11, %cst_8 {dimension_numbers = #tpu.dot_dimension_numbers<[1], [0], [0], [1], [0, 0, 1, 1], [], []>} : vector<8x256xbf16>, vector<256x128xbf16>, vector<8x128xf32> -> vector<8x128xf32>
    %c0_9 = arith.constant 0 : index
    %c0_10 = arith.constant 0 : index
    %14 = vector.load %arg5[%c0_9, %c0_10] : memref<1x128xf32, #tpu.memory_space<vmem>>, vector<1x128xf32>
    %15 = vector.broadcast %14 : vector<1x128xf32> to vector<8x128xf32>
    %16 = arith.addf %13, %15 : vector<8x128xf32>
    %c0_11 = arith.constant 0 : index
    %c0_12 = arith.constant 0 : index
    %17 = vector.load %arg6[%c0_11, %c0_12] : memref<8x128xf32, #tpu.memory_space<vmem>>, vector<8x128xf32>
    tpu.vector_store %arg6[%c0_11, %c0_12], %16 {strides = array<i32>} : memref<8x128xf32, #tpu.memory_space<vmem>>, vector<8x128xf32>,
    return
  }
  func.func @transform_0(%arg0: i32) -> (i32, i32) {
    %c0_i32 = arith.constant 0 : i32
    %c0_i32_0 = arith.constant 0 : i32
    return %arg0, %c0_i32 : i32, i32
  }
  func.func @transform_1(%arg0: i32) -> (i32, i32) {
    %c0_i32 = arith.constant 0 : i32
    %c0_i32_0 = arith.constant 0 : i32
    %c0_i32_1 = arith.constant 0 : i32
    return %c0_i32, %c0_i32_0 : i32, i32
  }
  func.func @transform_2(%arg0: i32) -> (i32, i32) {
    %c0_i32 = arith.constant 0 : i32
    %c0_i32_0 = arith.constant 0 : i32
    %c0_i32_1 = arith.constant 0 : i32
    return %c0_i32, %c0_i32_0 : i32, i32
  }
  func.func @transform_3(%arg0: i32) -> (i32, i32) {
    %c0_i32 = arith.constant 0 : i32
    %c0_i32_0 = arith.constant 0 : i32
    %c0_i32_1 = arith.constant 0 : i32
    return %c0_i32, %c0_i32_0 : i32, i32
  }
  func.func @transform_4(%arg0: i32) -> (i32, i32) {
    %c0_i32 = arith.constant 0 : i32
    %c0_i32_0 = arith.constant 0 : i32
    %c0_i32_1 = arith.constant 0 : i32
    return %c0_i32, %c0_i32_0 : i32, i32
  }
  func.func @transform_5(%arg0: i32) -> (i32, i32) {
    %c0_i32 = arith.constant 0 : i32
    %c0_i32_0 = arith.constant 0 : i32
    return %arg0, %c0_i32 : i32, i32
  }
}

</mosaic_0001>

<llo_original>
// kernel: tpu_custom_call.1
$region0: #{tpu_custom_call.1}
  #allocation0 [shape = 'u32[]', space=smem, size = 0x4, offset = 0x4, fixed_abs, tag = 'smem constant byte address 0x4 - core index']
  #allocation1 [shape = 'u32[144,128]{1,0:T(1,128)}', space=vmem, size = 0x12000, scoped, tag = 'internal scratch']
  %s0 = inlined_call_operand.hbm [shape: f32[16,128], index: 0, kind: input, shape index: {}]
  %s1 = inlined_call_operand.hbm [shape: f32[128,256], index: 1, kind: input, shape index: {}]
  %s2 = inlined_call_operand.vmem [shape: f32[1,256], index: 2, kind: input, shape index: {}]
  %s3 = inlined_call_operand.hbm [shape: f32[256,128], index: 3, kind: input, shape index: {}]
  %s4 = inlined_call_operand.vmem [shape: f32[1,128], index: 4, kind: input, shape index: {}]
  %s5 = inlined_call_operand.hbm [shape: f32[16,128], index: 5, kind: output, shape index: {}]
  %s6 = sld [smem:[#allocation0]]
  $region65: #{tpu_custom_call.1} parent=0
    _
  %s8 = ssub.s32 1, %s6
  %s9 = scalar_select 0, %s8, %s6
  $region1: #{tpu_custom_call.1} parent=0
    #allocation2 [shape = 'u8[8192]{0}', space=vmem, size = 0x2000, scoped, tag = 'input window, operand 0']
    #allocation3 [shape = 's32[2]{0}', space=sflag, size = 0x8, scoped, tag = 'scoped memory for tpu_custom_call.1']
    #allocation4 [shape = 's32[2]{0}', space=sflag, size = 0x8, scoped, tag = 'scoped memory for tpu_custom_call.1']
    #allocation5 [shape = 'u8[131072]{0}', space=vmem, size = 0x20000, scoped, tag = 'input window, operand 1, single buffered']
    #allocation6 [shape = 's32[1]{0}', space=sflag, size = 0x4, scoped, tag = 'scoped memory for tpu_custom_call.1']
    #allocation7 [shape = 'u8[131072]{0}', space=vmem, size = 0x20000, scoped, tag = 'input window, operand 3, single buffered']
    #allocation8 [shape = 'u8[8192]{0}', space=vmem, size = 0x2000, scoped, tag = 'output window, operand 0']
    %10 = vsyncpa [#allocation3], 0
    %s11 = scalar_lea.sflag [#allocation3], 1
    %12 = vsyncpa %s11, 0
    %13 = vsyncpa [#allocation6], 0
    %14 = vsyncpa [#allocation4], 0
    %s15 = scalar_lea.sflag [#allocation4], 1
    %16 = vsyncpa %s15, 0
    loop: start=0, step=1, limit=4
    $region2: #{tpu_custom_call.1} parent=1 // loop_pre_header
      _
    $region3: #{tpu_custom_call.1} parent=1 // loop_header
      %s18 = sphi 0, %s22
      %p19 = scmp.ge.s32.totalorder %s18, 4
      %s28 = sphi 0, %s30
      %s31 = sphi 0, %s28
      %s32 = sphi 0, %s31
      %s48 = sphi 0, %s32
      %s52 = sphi 0, %s52
      %s54 = sphi 0, %s52
      %s55 = sphi 0, %s54
      %s69 = sphi 0, %s55
      %s73 = sphi 0, %s73
      %s75 = sphi 0, %s73
      %s76 = sphi 0, %s75
      %s90 = sphi 0, %s76
      %s94 = sphi 0, %s94
      %s96 = sphi 0, %s94
      %s97 = sphi 0, %s96
      %s111 = sphi 0, %s97
      %s115 = sphi 0, %s115
      %s117 = sphi 0, %s115
      %s118 = sphi 0, %s117
      %s132 = sphi 0, %s118
      %s138 = sphi 0, %s140
      %s141 = sphi 0, %s138
      %s142 = sphi 0, %s141
      %s158 = sphi 0, %s142
    $region4: #{tpu_custom_call.1} parent=1 // loop_header_branch
      %21 = sbr.rel (%p19) target = $region8
    $region5: #{tpu_custom_call.1} parent=1 // loop_body
      %s23 = ssub.s32 %s18, 1
      %s24 = ssub.s32 %s18, 2
      %s25 = sadd.s32 %s18, 1
      %s26 = ssub.s32 %s18, %s25
      %p27 = scmp.eq.s32.totalorder %s26, 0
      %s29 = sadd.s32 %s28, 1
      %s30 = scalar_select %p27, %s28, %s29
      %p33 = pneg %p27
      %p34 = scmp.eq.s32.totalorder %s18, 1
      %p35 = por %p33, %p34
      %p36 = scmp.ne.s32.totalorder %s28, %s31
      %p37 = scmp.eq.s32.totalorder %s18, 0
      %p38 = por %p36, %p37
      %p39 = scmp.ne.s32.totalorder %s28, %s31
      %p40 = scmp.eq.s32.totalorder %s23, 1
      %p41 = por %p39, %p40
      %p42 = scmp.ne.s32.totalorder %s31, %s32
      %p43 = scmp.eq.s32.totalorder %s23, 0
      %p44 = por %p42, %p43
      %p45 = scmp.ne.s32.totalorder %s31, %s32
      %p46 = scmp.eq.s32.totalorder %s24, 1
      %p47 = por %p45, %p46
      %p49 = scmp.ne.s32.totalorder %s32, %s48
      %p50 = scmp.eq.s32.totalorder %s24, 0
      %p51 = por %p49, %p50
      %s53 = sadd.s32 %s52, 1
      %p56 = scmp.eq.s32.totalorder %s18, 1
      %p57 = scmp.ne.s32.totalorder %s52, %s54
      %p58 = scmp.eq.s32.totalorder %s18, 0
      %p59 = por %p57, %p58
      %p60 = scmp.ne.s32.totalorder %s52, %s54
      %p61 = scmp.eq.s32.totalorder %s23, 1
      %p62 = por %p60, %p61
      %p63 = scmp.ne.s32.totalorder %s54, %s55
      %p64 = scmp.eq.s32.totalorder %s23, 0
      %p65 = por %p63, %p64
      %p66 = scmp.ne.s32.totalorder %s54, %s55
      %p67 = scmp.eq.s32.totalorder %s24, 1
      %p68 = por %p66, %p67
      %p70 = scmp.ne.s32.totalorder %s55, %s69
      %p71 = scmp.eq.s32.totalorder %s24, 0
      %p72 = por %p70, %p71
      %s74 = sadd.s32 %s73, 1
      %p77 = scmp.eq.s32.totalorder %s18, 1
      %p78 = scmp.ne.s32.totalorder %s73, %s75
      %p79 = scmp.eq.s32.totalorder %s18, 0
      %p80 = por %p78, %p79
      %p81 = scmp.ne.s32.totalorder %s73, %s75
      %p82 = scmp.eq.s32.totalorder %s23, 1
      %p83 = por %p81, %p82
      %p84 = scmp.ne.s32.totalorder %s75, %s76
      %p85 = scmp.eq.s32.totalorder %s23, 0
      %p86 = por %p84, %p85
      %p87 = scmp.ne.s32.totalorder %s75, %s76
      %p88 = scmp.eq.s32.totalorder %s24, 1
      %p89 = por %p87, %p88
      %p91 = scmp.ne.s32.totalorder %s76, %s90
      %p92 = scmp.eq.s32.totalorder %s24, 0
      %p93 = por %p91, %p92
      %s95 = sadd.s32 %s94, 1
      %p98 = scmp.eq.s32.totalorder %s18, 1
      %p99 = scmp.ne.s32.totalorder %s94, %s96
      %p100 = scmp.eq.s32.totalorder %s18, 0
      %p101 = por %p99, %p100
      %p102 = scmp.ne.s32.totalorder %s94, %s96
      %p103 = scmp.eq.s32.totalorder %s23, 1
      %p104 = por %p102, %p103
      %p105 = scmp.ne.s32.totalorder %s96, %s97
      %p106 = scmp.eq.s32.totalorder %s23, 0
      %p107 = por %p105, %p106
      %p108 = scmp.ne.s32.totalorder %s96, %s97
      %p109 = scmp.eq.s32.totalorder %s24, 1
      %p110 = por %p108, %p109
      %p112 = scmp.ne.s32.totalorder %s97, %s111
      %p113 = scmp.eq.s32.totalorder %s24, 0
      %p114 = por %p112, %p113
      %s116 = sadd.s32 %s115, 1
      %p119 = scmp.eq.s32.totalorder %s18, 1
      %p120 = scmp.ne.s32.totalorder %s115, %s117
      %p121 = scmp.eq.s32.totalorder %s18, 0
      %p122 = por %p120, %p121
      %p123 = scmp.ne.s32.totalorder %s115, %s117
      %p124 = scmp.eq.s32.totalorder %s23, 1
      %p125 = por %p123, %p124
      %p126 = scmp.ne.s32.totalorder %s117, %s118
      %p127 = scmp.eq.s32.totalorder %s23, 0
      %p128 = por %p126, %p127
      %p129 = scmp.ne.s32.totalorder %s117, %s118
      %p130 = scmp.eq.s32.totalorder %s24, 1
      %p131 = por %p129, %p130
      %p133 = scmp.ne.s32.totalorder %s118, %s132
      %p134 = scmp.eq.s32.totalorder %s24, 0
      %p135 = por %p133, %p134
      %s136 = ssub.s32 %s18, %s25
      %p137 = scmp.eq.s32.totalorder %s136, 0
      %s139 = sadd.s32 %s138, 1
      %s140 = scalar_select %p137, %s138, %s139
      %p143 = pneg %p137
      %p144 = scmp.eq.s32.totalorder %s18, 1
      %p145 = por %p143, %p144
      %p146 = scmp.ne.s32.totalorder %s138, %s141
      %p147 = scmp.eq.s32.totalorder %s18, 0
      %p148 = por %p146, %p147
      %p149 = scmp.ne.s32.totalorder %s138, %s141
      %p150 = scmp.eq.s32.totalorder %s23, 1
      %p151 = por %p149, %p150
      %p152 = scmp.ne.s32.totalorder %s141, %s142
      %p153 = scmp.eq.s32.totalorder %s23, 0
      %p154 = por %p152, %p153
      %p155 = scmp.ne.s32.totalorder %s141, %s142
      %p156 = scmp.eq.s32.totalorder %s24, 1
      %p157 = por %p155, %p156
      %p159 = scmp.ne.s32.totalorder %s142, %s158
      %p160 = scmp.eq.s32.totalorder %s24, 0
      %p161 = por %p159, %p160
      %p162 = scmp.le.s32.totalorder 1, %s18
      %p163 = scmp.lt.s32.totalorder %s18, 3
      %p164 = pnand %p162, %p163
      %p165 = pneg %p164
      // Predicated region
      $region9: #{tpu_custom_call.1} parent=5 // pred_check
        _
      $region10: #{tpu_custom_call.1} parent=5 // pred_check_branch
        %167 = sbr.rel (%p164) target = $region12
      $region11: #{tpu_custom_call.1} parent=5 // pred_region
        %s168 = ssub.s32 %s18, 1
        // Predicated region
        $region13: #{tpu_custom_call.1} parent=11 // pred_check
          %p169 = pneg %p65
        $region14: #{tpu_custom_call.1} parent=11 // pred_check_branch
          %171 = sbr.rel (%p169) target = $region16
        $region15: #{tpu_custom_call.1} parent=11 // pred_region
          %s173 = ssub.s32 4096, 4096
          %174 = vsyncadd [#allocation6], %s173
          %s175 = sshll.u32 [#allocation5], 4
          %s176 = int_to_ptr.vmem [resolvable:$true] %s175
          %181 = dma.hbm_to_vmem [thread:$0]  %s1, 4096, %s176, [#allocation6], 256, 256, 16
        $region16: #{tpu_custom_call.1} parent=11 // pred_fallthru
          _
        // Predicated region
        $region17: #{tpu_custom_call.1} parent=11 // pred_check
          %p182 = pneg %p86
        $region18: #{tpu_custom_call.1} parent=11 // pred_check_branch
          %184 = sbr.rel (%p182) target = $region20
        $region19: #{tpu_custom_call.1} parent=11 // pred_region
          _
        $region20: #{tpu_custom_call.1} parent=11 // pred_fallthru
          _
        // Predicated region
        $region21: #{tpu_custom_call.1} parent=11 // pred_check
          %p185 = pneg %p107
        $region22: #{tpu_custom_call.1} parent=11 // pred_check_branch
          %187 = sbr.rel (%p185) target = $region24
        $region23: #{tpu_custom_call.1} parent=11 // pred_region
          %s189 = ssub.s32 4096, 4096
          %190 = vsyncadd [#allocation6], %s189
          %s191 = sshll.u32 [#allocation7], 4
          %s192 = int_to_ptr.vmem [resolvable:$true] %s191
          %197 = dma.hbm_to_vmem [thread:$0]  %s3, 4096, %s192, [#allocation6], 128, 128, 8
        $region24: #{tpu_custom_call.1} parent=11 // pred_fallthru
          _
        // Predicated region
        $region25: #{tpu_custom_call.1} parent=11 // pred_check
          %p198 = pneg %p128
        $region26: #{tpu_custom_call.1} parent=11 // pred_check_branch
          %200 = sbr.rel (%p198) target = $region28
        $region27: #{tpu_custom_call.1} parent=11 // pred_region
          _
        $region28: #{tpu_custom_call.1} parent=11 // pred_fallthru
          _
      $region12: #{tpu_custom_call.1} parent=5 // pred_fallthru
        _
      %p201 = scmp.lt.s32.totalorder %s18, 2
      // Predicated region
      $region29: #{tpu_custom_call.1} parent=5 // pred_check
        %p202 = pneg %p201
      $region30: #{tpu_custom_call.1} parent=5 // pred_check_branch
        %204 = sbr.rel (%p202) target = $region32
      $region31: #{tpu_custom_call.1} parent=5 // pred_region
        // Predicated region
        $region33: #{tpu_custom_call.1} parent=31 // pred_check
          %p205 = pneg %p38
        $region34: #{tpu_custom_call.1} parent=31 // pred_check_branch
          %207 = sbr.rel (%p205) target = $region36
        $region35: #{tpu_custom_call.1} parent=31 // pred_region
          %s208 = sand.u32 %s28, 1
          %s209 = scalar_lea.sflag [#allocation3], %s208
          %s210 = sand.u32 %s28, 1
          %s211 = smul.addr %s210, 8
          %s212 = scalar_lea.vmem [#allocation2], %s211
          %s214 = ssub.s32 128, 128
          %215 = vsyncadd %s209, %s214
          %s216 = smul.addr %s18, 128
          %s217 = scalar_lea.hbm %s0, %s216
          %s219 = sshll.u32 %s212, 4
          %s220 = int_to_ptr.vmem [resolvable:$true] %s219
          %222 = dma.hbm_to_vmem [thread:$0]  %s217, 128, %s220, %s209
        $region36: #{tpu_custom_call.1} parent=31 // pred_fallthru
          _
      $region32: #{tpu_custom_call.1} parent=5 // pred_fallthru
        _
      %p223 = scmp.le.s32.totalorder 1, %s18
      %p224 = scmp.lt.s32.totalorder %s18, 3
      %p225 = pnand %p223, %p224
      %p226 = pneg %p225
      // Predicated region
      $region37: #{tpu_custom_call.1} parent=5 // pred_check
        _
      $region38: #{tpu_custom_call.1} parent=5 // pred_check_branch
        %228 = sbr.rel (%p225) target = $region40
      $region39: #{tpu_custom_call.1} parent=5 // pred_region
        %s229 = ssub.s32 %s18, 1
        %s230 = sand.u32 %s31, 1
        %s231 = scalar_lea.sflag [#allocation3], %s230
        %s232 = sand.u32 %s31, 1
        %s233 = smul.addr %s232, 8
        %s234 = scalar_lea.vmem [#allocation2], %s233
        // Predicated region
        $region41: #{tpu_custom_call.1} parent=39 // pred_check
          %p235 = pneg %p44
        $region42: #{tpu_custom_call.1} parent=39 // pred_check_branch
          %237 = sbr.rel (%p235) target = $region44
        $region43: #{tpu_custom_call.1} parent=39 // pred_region
          %238 = dma.done %s231, 128
        $region44: #{tpu_custom_call.1} parent=39 // pred_fallthru
          _
        // Predicated region
        $region45: #{tpu_custom_call.1} parent=39 // pred_check
          %p239 = pneg %p65
        $region46: #{tpu_custom_call.1} parent=39 // pred_check_branch
          %241 = sbr.rel (%p239) target = $region48
        $region47: #{tpu_custom_call.1} parent=39 // pred_region
          %242 = dma.done [#allocation6], 4096
        $region48: #{tpu_custom_call.1} parent=39 // pred_fallthru
          _
        // Predicated region
        $region49: #{tpu_custom_call.1} parent=39 // pred_check
          %p243 = pneg %p107
        $region50: #{tpu_custom_call.1} parent=39 // pred_check_branch
          %245 = sbr.rel (%p243) target = $region52
        $region51: #{tpu_custom_call.1} parent=39 // pred_region
          %246 = dma.done [#allocation6], 4096
        $region52: #{tpu_custom_call.1} parent=39 // pred_fallthru
          _
        %s247 = sand.u32 %s31, 1
        %s248 = scalar_lea.sflag [#allocation3], %s247
        %s249 = sand.u32 %s31, 1
        %s250 = smul.addr %s249, 8
        %s251 = scalar_lea.vmem [#allocation2], %s250
        %p252 = pneg %p44
        %p253 = pneg %p41
        %p254 = pneg %p65
        %p255 = pneg %p62
        %p256 = pneg %p86
        %p257 = pneg %p83
        %p258 = pneg %p107
        %p259 = pneg %p104
        %p260 = pneg %p128
        %p261 = pneg %p125
        %p262 = pneg %p154
        %p263 = pneg %p151
        %s264 = sand.u32 %s141, 1
        %s265 = scalar_lea.sflag [#allocation4], %s264
        %s266 = sand.u32 %s141, 1
        %s267 = smul.addr %s266, 8
        %s268 = scalar_lea.vmem [#allocation8], %s267
        %v270 = vld [vmem:[%s234] sm:$0xff]
        %v271 = vpack.c.bf16 %v270, %v270
        %v272 = vld [vmem:[#allocation5] sm:$0xff]
        %v273 = vld [vmem:[#allocation5 + $0x8] sm:$0xff]
        %v274 = vld [vmem:[#allocation5 + $0x10] sm:$0xff]
        %v275 = vld [vmem:[#allocation5 + $0x18] sm:$0xff]
        %v276 = vld [vmem:[#allocation5 + $0x20] sm:$0xff]
        %v277 = vld [vmem:[#allocation5 + $0x28] sm:$0xff]
        %v278 = vld [vmem:[#allocation5 + $0x30] sm:$0xff]
        %v279 = vld [vmem:[#allocation5 + $0x38] sm:$0xff]
        %v280 = vld [vmem:[#allocation5 + $0x40] sm:$0xff]
        %v281 = vld [vmem:[#allocation5 + $0x48] sm:$0xff]
        %v282 = vld [vmem:[#allocation5 + $0x50] sm:$0xff]
        %v283 = vld [vmem:[#allocation5 + $0x58] sm:$0xff]
        %v284 = vld [vmem:[#allocation5 + $0x60] sm:$0xff]
        %v285 = vld [vmem:[#allocation5 + $0x68] sm:$0xff]
        %v286 = vld [vmem:[#allocation5 + $0x70] sm:$0xff]
        %v287 = vld [vmem:[#allocation5 + $0x78] sm:$0xff]
        %v288 = vld [vmem:[#allocation5 + $0x80] sm:$0xff]
        %v289 = vld [vmem:[#allocation5 + $0x88] sm:$0xff]
        %v290 = vld [vmem:[#allocation5 + $0x90] sm:$0xff]
        %v291 = vld [vmem:[#allocation5 + $0x98] sm:$0xff]
        %v292 = vld [vmem:[#allocation5 + $0xa0] sm:$0xff]
        %v293 = vld [vmem:[#allocation5 + $0xa8] sm:$0xff]
        %v294 = vld [vmem:[#allocation5 + $0xb0] sm:$0xff]
        %v295 = vld [vmem:[#allocation5 + $0xb8] sm:$0xff]
        %v296 = vld [vmem:[#allocation5 + $0xc0] sm:$0xff]
        %v297 = vld [vmem:[#allocation5 + $0xc8] sm:$0xff]
        %v298 = vld [vmem:[#allocation5 + $0xd0] sm:$0xff]
        %v299 = vld [vmem:[#allocation5 + $0xd8] sm:$0xff]
        %v300 = vld [vmem:[#allocation5 + $0xe0] sm:$0xff]
        %v301 = vld [vmem:[#allocation5 + $0xe8] sm:$0xff]
        %v302 = vld [vmem:[#allocation5 + $0xf0] sm:$0xff]
        %v303 = vld [vmem:[#allocation5 + $0xf8] sm:$0xff]
        %v304 = vpack.c.bf16 %v274, %v272
        %v305 = vpack.c.bf16 %v275, %v273
        %v306 = vpack.c.bf16 %v278, %v276
        %v307 = vpack.c.bf16 %v279, %v277
        %v308 = vpack.c.bf16 %v282, %v280
        %v309 = vpack.c.bf16 %v283, %v281
        %v310 = vpack.c.bf16 %v286, %v284
        %v311 = vpack.c.bf16 %v287, %v285
        %v312 = vpack.c.bf16 %v290, %v288
        %v313 = vpack.c.bf16 %v291, %v289
        %v314 = vpack.c.bf16 %v294, %v292
        %v315 = vpack.c.bf16 %v295, %v293
        %v316 = vpack.c.bf16 %v298, %v296
        %v317 = vpack.c.bf16 %v299, %v297
        %v318 = vpack.c.bf16 %v302, %v300
        %v319 = vpack.c.bf16 %v303, %v301
        %v320 = vld [vmem:[%s2] sm:$0x3]
        %v322 = vlaneseq
        %v323 = vshrl.u32 %v322, 7
        %v324 = vsub.s32 0, %v323
        %v325 = vrot.slane %v320, %v324
        %v326 = vlaneseq
        %v327 = vshrl.u32 %v326, 7
        %v328 = vsub.s32 1, %v327
        %v329 = vrot.slane %v320, %v328
        %332 = vmatprep.subr.bf16.mxu0 %v319
        %333 = vmatpush1.bf16.msra.mxu0 %v318
        %334 = vmatprep.subr.bf16.mxu0 %v317
        %335 = vmatpush1.bf16.msra.mxu0 %v316
        %336 = vmatprep.subr.bf16.mxu0 %v315
        %337 = vmatpush1.bf16.msra.mxu0 %v314
        %338 = vmatprep.subr.bf16.mxu0 %v313
        %339 = vmatpush1.bf16.msra.mxu0 %v312
        %340 = vmatprep.subr.bf16.mxu0 %v311
        %341 = vmatpush1.bf16.msra.mxu0 %v310
        %342 = vmatprep.subr.bf16.mxu0 %v309
        %343 = vmatpush1.bf16.msra.mxu0 %v308
        %344 = vmatprep.subr.bf16.mxu0 %v307
        %345 = vmatpush1.bf16.msra.mxu0 %v306
        %346 = vmatprep.subr.bf16.mxu0 %v305
        %347 = vmatpush1.bf16.msra.mxu0 %v304
        %348 = vmatprep.subr.bf16.mxu0 0
        %349 = vmatpush2.bf16.msra.mxu0 0
        %350 = vmatprep.subr.bf16.mxu0 0
        %351 = vmatpush2.bf16.msra.mxu0 0
        %352 = vmatprep.subr.bf16.mxu0 0
        %353 = vmatpush2.bf16.msra.mxu0 0
        %354 = vmatprep.subr.bf16.mxu0 0
        %355 = vmatpush2.bf16.msra.mxu0 0
        %356 = vmatprep.subr.bf16.mxu0 0
        %357 = vmatpush2.bf16.msra.mxu0 0
        %358 = vmatprep.subr.bf16.mxu0 0
        %359 = vmatpush2.bf16.msra.mxu0 0
        %360 = vmatprep.subr.bf16.mxu0 0
        %361 = vmatpush2.bf16.msra.mxu0 0
        %362 = vmatprep.subr.bf16.mxu0 0
        %363 = vmatpush2.bf16.msra.mxu0 0
        %364 = vmatprep.mubr.bf16.mxu0 0
        %365 = vmatmul.mubr.bf16.gmra.mxu0 %v271
        %v366 = vpop.f32.mrf.mxu0
        %v367 = vadd.f32 %v325, %v366
        %v368 = vpop.f32.mrf.mxu0
        %v369 = vadd.f32 %v329, %v368
        %v370 = vpop.f32.mrf.mxu0
        %v371 = vpop.f32.mrf.mxu0
        %372 = vdwg.mxu0
        %v373 = vmax.f32 %v367, 0.0
        %v374 = vmax.f32 %v369, 0.0
        %v375 = vld [vmem:[#allocation7] sm:$0xff]
        %v376 = vld [vmem:[#allocation7 + $0x8] sm:$0xff]
        %v377 = vld [vmem:[#allocation7 + $0x10] sm:$0xff]
        %v378 = vld [vmem:[#allocation7 + $0x18] sm:$0xff]
        %v379 = vld [vmem:[#allocation7 + $0x20] sm:$0xff]
        %v380 = vld [vmem:[#allocation7 + $0x28] sm:$0xff]
        %v381 = vld [vmem:[#allocation7 + $0x30] sm:$0xff]
        %v382 = vld [vmem:[#allocation7 + $0x38] sm:$0xff]
        %v383 = vld [vmem:[#allocation7 + $0x40] sm:$0xff]
        %v384 = vld [vmem:[#allocation7 + $0x48] sm:$0xff]
        %v385 = vld [vmem:[#allocation7 + $0x50] sm:$0xff]
        %v386 = vld [vmem:[#allocation7 + $0x58] sm:$0xff]
        %v387 = vld [vmem:[#allocation7 + $0x60] sm:$0xff]
        %v388 = vld [vmem:[#allocation7 + $0x68] sm:$0xff]
        %v389 = vld [vmem:[#allocation7 + $0x70] sm:$0xff]
        %v390 = vld [vmem:[#allocation7 + $0x78] sm:$0xff]
        %v391 = vld [vmem:[#allocation7 + $0x80] sm:$0xff]
        %v392 = vld [vmem:[#allocation7 + $0x88] sm:$0xff]
        %v393 = vld [vmem:[#allocation7 + $0x90] sm:$0xff]
        %v394 = vld [vmem:[#allocation7 + $0x98] sm:$0xff]
        %v395 = vld [vmem:[#allocation7 + $0xa0] sm:$0xff]
        %v396 = vld [vmem:[#allocation7 + $0xa8] sm:$0xff]
        %v397 = vld [vmem:[#allocation7 + $0xb0] sm:$0xff]
        %v398 = vld [vmem:[#allocation7 + $0xb8] sm:$0xff]
        %v399 = vld [vmem:[#allocation7 + $0xc0] sm:$0xff]
        %v400 = vld [vmem:[#allocation7 + $0xc8] sm:$0xff]
        %v401 = vld [vmem:[#allocation7 + $0xd0] sm:$0xff]
        %v402 = vld [vmem:[#allocation7 + $0xd8] sm:$0xff]
        %v403 = vld [vmem:[#allocation7 + $0xe0] sm:$0xff]
        %v404 = vld [vmem:[#allocation7 + $0xe8] sm:$0xff]
        %v405 = vld [vmem:[#allocation7 + $0xf0] sm:$0xff]
        %v406 = vld [vmem:[#allocation7 + $0xf8] sm:$0xff]
        %v407 = vpack.c.bf16 %v376, %v375
        %v408 = vpack.c.bf16 %v378, %v377
        %v409 = vpack.c.bf16 %v380, %v379
        %v410 = vpack.c.bf16 %v382, %v381
        %v411 = vpack.c.bf16 %v384, %v383
        %v412 = vpack.c.bf16 %v386, %v385
        %v413 = vpack.c.bf16 %v388, %v387
        %v414 = vpack.c.bf16 %v390, %v389
        %v415 = vpack.c.bf16 %v392, %v391
        %v416 = vpack.c.bf16 %v394, %v393
        %v417 = vpack.c.bf16 %v396, %v395
        %v418 = vpack.c.bf16 %v398, %v397
        %v419 = vpack.c.bf16 %v400, %v399
        %v420 = vpack.c.bf16 %v402, %v401
        %v421 = vpack.c.bf16 %v404, %v403
        %v422 = vpack.c.bf16 %v406, %v405
        %v423 = vpack.c.bf16 %v373, %v373
        %v424 = vpack.c.bf16 %v374, %v374
        %v425 = vld [vmem:[%s4] sm:$0x1]
        %v427 = vlaneseq
        %v428 = vshrl.u32 %v427, 7
        %v429 = vsub.s32 0, %v428
        %v430 = vrot.slane %v425, %v429
        %432 = vmatprep.subr.bf16.mxu0 0
        %433 = vmatpush1.bf16.msra.mxu0 %v414
        %434 = vmatprep.subr.bf16.mxu0 0
        %435 = vmatpush1.bf16.msra.mxu0 %v413
        %436 = vmatprep.subr.bf16.mxu0 0
        %437 = vmatpush1.bf16.msra.mxu0 %v412
        %438 = vmatprep.subr.bf16.mxu0 0
        %439 = vmatpush1.bf16.msra.mxu0 %v411
        %440 = vmatprep.subr.bf16.mxu0 0
        %441 = vmatpush1.bf16.msra.mxu0 %v410
        %442 = vmatprep.subr.bf16.mxu0 0
        %443 = vmatpush1.bf16.msra.mxu0 %v409
        %444 = vmatprep.subr.bf16.mxu0 0
        %445 = vmatpush1.bf16.msra.mxu0 %v408
        %446 = vmatprep.subr.bf16.mxu0 0
        %447 = vmatpush1.bf16.msra.mxu0 %v407
        %448 = vmatprep.subr.bf16.mxu0 0
        %449 = vmatpush2.bf16.msra.mxu0 %v422
        %450 = vmatprep.subr.bf16.mxu0 0
        %451 = vmatpush2.bf16.msra.mxu0 %v421
        %452 = vmatprep.subr.bf16.mxu0 0
        %453 = vmatpush2.bf16.msra.mxu0 %v420
        %454 = vmatprep.subr.bf16.mxu0 0
        %455 = vmatpush2.bf16.msra.mxu0 %v419
        %456 = vmatprep.subr.bf16.mxu0 0
        %457 = vmatpush2.bf16.msra.mxu0 %v418
        %458 = vmatprep.subr.bf16.mxu0 0
        %459 = vmatpush2.bf16.msra.mxu0 %v417
        %460 = vmatprep.subr.bf16.mxu0 0
        %461 = vmatpush2.bf16.msra.mxu0 %v416
        %462 = vmatprep.subr.bf16.mxu0 0
        %463 = vmatpush2.bf16.msra.mxu0 %v415
        %464 = vmatprep.mubr.bf16.mxu0 %v424
        %465 = vmatmul.mubr.bf16.gmra.mxu0 %v423
        %v466 = vpop.f32.mrf.mxu0
        %v467 = vadd.f32 %v430, %v466
        %v468 = vpop.f32.mrf.mxu0
        %v469 = vpop.f32.mrf.mxu0
        %v470 = vpop.f32.mrf.mxu0
        %471 = vdwg.mxu0
        %472 = vst [vmem:[%s268] sm:$0xff] %v467
        %s473 = sand.u32 %s141, 1
        %s474 = scalar_lea.sflag [#allocation4], %s473
        %s475 = sand.u32 %s141, 1
        %s476 = smul.addr %s475, 8
        %s477 = scalar_lea.vmem [#allocation8], %s476
        // Predicated region
        $region53: #{tpu_custom_call.1} parent=39 // pred_check
          %p478 = pneg %p151
        $region54: #{tpu_custom_call.1} parent=39 // pred_check_branch
          %480 = sbr.rel (%p478) target = $region56
        $region55: #{tpu_custom_call.1} parent=39 // pred_region
          %s482 = ssub.s32 128, 128
          %483 = vsyncadd %s474, %s482
          %s484 = smul.addr %s23, 128
          %s485 = scalar_lea.hbm %s5, %s484
          %s487 = sshll.u32 %s477, 4
          %s488 = int_to_ptr.vmem [resolvable:$true] %s487
          %490 = dma.vmem_to_hbm [thread:$0]  %s488, 128, %s485, %s474
        $region56: #{tpu_custom_call.1} parent=39 // pred_fallthru
          _
      $region40: #{tpu_custom_call.1} parent=5 // pred_fallthru
        _
      %p491 = scmp.le.s32.totalorder 2, %s18
      // Predicated region
      $region57: #{tpu_custom_call.1} parent=5 // pred_check
        %p492 = pneg %p491
      $region58: #{tpu_custom_call.1} parent=5 // pred_check_branch
        %494 = sbr.rel (%p492) target = $region60
      $region59: #{tpu_custom_call.1} parent=5 // pred_region
        %s495 = ssub.s32 %s18, 2
        // Predicated region
        $region61: #{tpu_custom_call.1} parent=59 // pred_check
          %p496 = pneg %p157
        $region62: #{tpu_custom_call.1} parent=59 // pred_check_branch
          %498 = sbr.rel (%p496) target = $region64
        $region63: #{tpu_custom_call.1} parent=59 // pred_region
          %s499 = sand.u32 %s142, 1
          %s500 = scalar_lea.sflag [#allocation4], %s499
          %s501 = sand.u32 %s142, 1
          %s502 = smul.addr %s501, 8
          %s503 = scalar_lea.vmem [#allocation8], %s502
          %504 = dma.done %s500, 128
        $region64: #{tpu_custom_call.1} parent=59 // pred_fallthru
          _
      $region60: #{tpu_custom_call.1} parent=5 // pred_fallthru
        _
    $region6: #{tpu_custom_call.1} parent=1 // loop_footer
      %s22 = sadd.s32 1, %s18
    $region7: #{tpu_custom_call.1} parent=1 // loop_footer_branch
      %17 = sbr.rel target = $region3
    $region8: #{tpu_custom_call.1} parent=1 // loop_exit
      _
    %505 = vsyncpa [#allocation3], 1
    %s506 = scalar_lea.sflag [#allocation3], 1
    %507 = vsyncpa %s506, 1
    %508 = vsyncpa [#allocation6], 1
    %509 = vsyncpa [#allocation4], 1
    %s510 = scalar_lea.sflag [#allocation4], 1
    %511 = vsyncpa %s510, 1

</llo_original>
